<compile_context>
chip_gen: v7x
topology: tpu7x:2x2x1
jax: 0.10.0
libtpu: 0.0.40
codegen_flags: <defaults>
</compile_context>

<pallas_src>
import jax
import jax.numpy as jnp
from jax.experimental import pallas as pl
from jax.experimental.pallas import tpu as pltpu

_H1 = 128      # first hidden width (also the packing lane width)
_H2 = 64       # second hidden width
_PACK_W = 128  # lanes of the packed parameter slab


def _round_up(n, m):
    return ((n + m - 1) // m) * m


def init_params(key, state_dim):
    """PyTorch-Linear-style init (uniform +/- 1/sqrt(fan_in)); weights stored (in, out)."""
    dims = [(state_dim, _H1), (_H1, _H2), (_H2, 1)]
    params = {}
    keys = jax.random.split(key, 2 * len(dims))
    for i, (fan_in, fan_out) in enumerate(dims):
        bound = 1.0 / jnp.sqrt(jnp.float32(fan_in))
        params[f"w{i + 1}"] = jax.random.uniform(
            keys[2 * i], (fan_in, fan_out), jnp.float32, -bound, bound)
        params[f"b{i + 1}"] = jax.random.uniform(
            keys[2 * i + 1], (1, fan_out), jnp.float32, -bound, bound)
    return params


def pack_params(params, state_dim, dtype=jnp.bfloat16):
    """Pack all weights/biases into one (128 + round_up(D,8) + 8, 128) slab.

    Packed ONCE, in the compute dtype (default bf16) -> no per-call cast pass and
    the resident param DMA is halved. Row layout (every region 8-row aligned):
      [0, 128)          : w2 zero-padded to (128, 128)   (cols >= 64 are 0)
      [128, 128+D8)     : w1 zero-padded to (D8, 128), D8 = round_up(D, 8)
      [128+D8, +8)      : vec block (8, 128):
                            row 0: b1 (128 lanes)
                            row 1: b2 zero-padded to 128 lanes
                            row 2: w3^T zero-padded to 128 lanes
                            row 3: b3 in lane 0
                            rows 4-7: zero
    """
    D = state_dim
    D8 = _round_up(D, 8)

    def lane_pad(a):
        return jnp.pad(a, ((0, 0), (0, _PACK_W - a.shape[1])))

    w1 = params["w1"]
    if D8 != D:
        w1 = jnp.pad(w1, ((0, D8 - D), (0, 0)))

    vec = jnp.zeros((8, _PACK_W), jnp.float32)
    vec = vec.at[0, :_H1].set(params["b1"].reshape(_H1))
    vec = vec.at[1, :_H2].set(params["b2"].reshape(_H2))
    vec = vec.at[2, :_H2].set(params["w3"].reshape(_H2))
    vec = vec.at[3, 0].set(params["b3"].reshape(())[()])

    slab = jnp.concatenate([lane_pad(params["w2"]), w1, vec], axis=0)
    return slab.astype(dtype)


def _value_mlp_kernel(x_ref, p_ref, o_ref):
    D = x_ref.shape[-1]               # static
    D8 = _round_up(D, 8)
    cdt = p_ref.dtype                 # compute dtype for MXU operands (from the packed slab)

    # In-kernel cast: HBM holds f32 x; casting in vregs avoids a wrapper-side HBM pass.
    x = x_ref[...].astype(cdt)                               # (tile_b, D)

    w2 = p_ref[0:_H1, :]                                     # (128, 128), cols >= 64 are 0
    w1 = p_ref[_H1:_H1 + D, :]                               # (D, 128)
    vec = p_ref[_H1 + D8:_H1 + D8 + 8, :]                    # (8, 128) aligned block
    b1 = vec[0:1, :].astype(jnp.float32)                     # (1, 128)
    b2 = vec[1:2, :].astype(jnp.float32)                     # (1, 128), lanes >= 64 are 0
    w3 = vec[2:3, :].astype(jnp.float32)                     # (1, 128), lanes >= 64 are 0
    b3 = vec[3:4, 0:1].astype(jnp.float32)                   # (1, 1)

    # Layer 1: (tile_b, D) @ (D, 128) on the MXU, f32 accumulation.
    h1 = jnp.dot(x, w1, preferred_element_type=jnp.float32) + b1
    h1 = jnp.maximum(h1, 0.0).astype(cdt)                    # keep MXU operands in cdt

    # Layer 2: (tile_b, 128) @ (128, 128); zero-padded output cols stay 0 through ReLU.
    h2 = jnp.dot(h1, w2, preferred_element_type=jnp.float32) + b2
    h2 = jnp.maximum(h2, 0.0)                                # f32 elementwise (v5e: no bf16 VPU)

    # Layer 3 (64 -> 1): VPU multiply + XLU lane reduce (no N=1 MXU matmul).
    out = jnp.sum(h2 * w3, axis=-1, keepdims=True) + b3
    o_ref[...] = out.astype(o_ref.dtype)


def value_network_forward(x, packed_params, *, block_b=2048):
    """x: (B, state_dim) f32 (kept f32 in HBM). packed_params: pack_params output.

    The packed slab's dtype IS the MXU-operand compute dtype (bf16 default).
    Returns (B, 1) f32.
    """
    B, D = x.shape
    D8 = _round_up(D, 8)
    R = _H1 + D8 + 8
    assert packed_params.shape == (R, _PACK_W), packed_params.shape
    cdt = jnp.dtype(packed_params.dtype)

    # VMEM budget per batch row, lane-padded (the real in-VMEM footprint):
    #   x block   : round_up(D,128) lanes * 4 B (f32)   * 2 (double buffer)
    #   out block : 128 lanes * 4 B (lane-padded (tile_b,1)) * 2 (double buffer)
    #   h1 spill  : 128 lanes * cdt bytes
    #   h2 spill  : 128 lanes * 4 B (f32 accumulate)
    d_lanes = _round_up(D, 128)
    per_row = (2 * d_lanes * 4) + (2 * 128 * 4) + (128 * cdt.itemsize) + (128 * 4)
    budget = 20 * 1024 * 1024                     # leave headroom under the 32 MiB limit
    max_rows = max(128, (budget // per_row) // 128 * 128)

    tile_b = min(block_b, max_rows)
    if B > 256:
        # Ensure >= 2 grid steps so v7x's two TensorCores both get work.
        half = _round_up(-(-B // 2), 128)
        tile_b = max(128, min(tile_b, half))
    else:
        tile_b = max(8, min(tile_b, _round_up(B, 8)))

    # No jnp.pad of x: cdiv grid; the partial edge block is safe because rows are
    # independent and out-of-bounds output rows are dropped.
    grid = (pl.cdiv(B, tile_b),)

    out = pl.pallas_call(
        _value_mlp_kernel,
        out_shape=jax.ShapeDtypeStruct((B, 1), jnp.float32),
        grid=grid,
        in_specs=[
            pl.BlockSpec((tile_b, D), lambda i: (i, 0)),     # x tile per grid step
            pl.BlockSpec((R, _PACK_W), lambda i: (0, 0)),    # params: constant block, resident
        ],
        out_specs=pl.BlockSpec((tile_b, 1), lambda i: (i, 0)),
        compiler_params=pltpu.CompilerParams(
            dimension_semantics=("parallel",),               # shards across v7x's 2 TCs
            vmem_limit_bytes=32 * 1024 * 1024,
        ),
    )(x, packed_params)
    return out


def value_network_ref(x, params):
    h1 = jnp.maximum(x @ params["w1"] + params["b1"], 0.0)
    h2 = jnp.maximum(h1 @ params["w2"] + params["b2"], 0.0)
    return h2 @ params["w3"] + params["b3"]


if __name__ == "__main__":
    key = jax.random.PRNGKey(0)
    k_param, k_x1, k_x2, k_x3 = jax.random.split(key, 4)

    state_dim = 8
    params = init_params(k_param, state_dim)
    packed_f32 = pack_params(params, state_dim, dtype=jnp.float32)   # exact-check path
    packed_bf16 = pack_params(params, state_dim)                      # default bf16 perf path

    # Small RL-style batch (latency path, single grid step), f32 slab -> tight tolerance.
    x_small = jax.random.normal(k_x1, (8, state_dim), jnp.float32)
    out_small = jax.block_until_ready(value_network_forward(x_small, packed_f32))
    ref_small = value_network_ref(x_small, params)
    assert out_small.shape == (8, 1), out_small.shape
    assert jnp.allclose(out_small, ref_small, atol=1e-5, rtol=1e-5), "small-batch mismatch"

    # Non-divisible batch: exercises the cdiv grid / partial edge block and the
    # >=2-grid-step split (tile_b = 512, grid = 2).
    x_mid = jax.random.normal(k_x2, (1000, state_dim), jnp.float32)
    out_mid = jax.block_until_ready(value_network_forward(x_mid, packed_f32))
    ref_mid = value_network_ref(x_mid, params)
    assert out_mid.shape == (1000, 1), out_mid.shape
    assert jnp.allclose(out_mid, ref_mid, atol=1e-4, rtol=1e-4), "mid-batch mismatch"

    # Larger batch on the default bf16-operand path (bf16 x/weights/biases in the
    # matmuls, f32 accumulate/elementwise) -> loose tolerance.
    x_big = jax.random.normal(k_x3, (4096, state_dim), jnp.float32)
    out_big = jax.block_until_ready(value_network_forward(x_big, packed_bf16))
    ref_big = value_network_ref(x_big, params)
    assert out_big.shape == (4096, 1), out_big.shape
    assert jnp.allclose(out_big, ref_big, atol=2e-1, rtol=5e-2), "bf16-path mismatch"

    print("KERNEL_OK")
</pallas_src>

<mosaic_0001>
module attributes {stable_mosaic.version = 11 : i64} {
  func.func @_value_mlp_kernel(%arg0: i32, %arg1: memref<8x8xf32, #tpu.memory_space<vmem>>, %arg2: memref<144x128xf32, #tpu.memory_space<vmem>>, %arg3: memref<8x1xf32, #tpu.memory_space<vmem>>) attributes {dimension_semantics = [#tpu.dimension_semantics<parallel>], iteration_bounds = array<i64: 1>, scalar_prefetch = 0 : i64, scratch_operands = 0 : i64, tpu.core_type = #tpu.core_type<tc>, window_params = [{transform_indices = @transform_0, window_bounds = array<i64: 8, 8>}, {pipeline_mode = #tpu.pipeline_mode<synchronous>, transform_indices = @transform_1, window_bounds = array<i64: 144, 128>}, {transform_indices = @transform_2, window_bounds = array<i64: 8, 1>}]} {
    %c0 = arith.constant 0 : index
    %c0_0 = arith.constant 0 : index
    %0 = vector.load %arg1[%c0, %c0_0] : memref<8x8xf32, #tpu.memory_space<vmem>>, vector<8x8xf32>
    %c0_1 = arith.constant 0 : index
    %c0_2 = arith.constant 0 : index
    %1 = vector.load %arg2[%c0_1, %c0_2] : memref<144x128xf32, #tpu.memory_space<vmem>>, vector<128x128xf32>
    %c128 = arith.constant 128 : index
    %c0_3 = arith.constant 0 : index
    %2 = vector.load %arg2[%c128, %c0_3] : memref<144x128xf32, #tpu.memory_space<vmem>>, vector<8x128xf32>
    %c136 = arith.constant 136 : index
    %c0_4 = arith.constant 0 : index
    %3 = vector.load %arg2[%c136, %c0_4] : memref<144x128xf32, #tpu.memory_space<vmem>>, vector<8x128xf32>
    %4 = vector.extract_strided_slice %3 {offsets = [0, 0], sizes = [1, 128], strides = [1, 1]} : vector<8x128xf32> to vector<1x128xf32>
    %5 = vector.extract_strided_slice %3 {offsets = [1, 0], sizes = [1, 128], strides = [1, 1]} : vector<8x128xf32> to vector<1x128xf32>
    %6 = vector.extract_strided_slice %3 {offsets = [2, 0], sizes = [1, 128], strides = [1, 1]} : vector<8x128xf32> to vector<1x128xf32>
    %7 = vector.extract_strided_slice %3 {offsets = [3, 0], sizes = [1, 1], strides = [1, 1]} : vector<8x128xf32> to vector<1x1xf32>
    %cst = arith.constant dense<0.000000e+00> : vector<8x128xf32>
    %8 = tpu.matmul %0, %2, %cst {dimension_numbers = #tpu.dot_dimension_numbers<[1], [0], [0], [1], [0, 0, 1, 1], [], []>} : vector<8x8xf32>, vector<8x128xf32>, vector<8x128xf32> -> vector<8x128xf32>
    %9 = vector.broadcast %4 : vector<1x128xf32> to vector<8x128xf32>
    %10 = arith.addf %8, %9 : vector<8x128xf32>
    %cst_5 = arith.constant 0.000000e+00 : f32
    %11 = vector.broadcast %cst_5 : f32 to vector<8x128xf32>
    %12 = arith.maximumf %10, %11 : vector<8x128xf32>
    %cst_6 = arith.constant dense<0.000000e+00> : vector<8x128xf32>
    %13 = tpu.matmul %12, %1, %cst_6 {dimension_numbers = #tpu.dot_dimension_numbers<[1], [0], [0], [1], [0, 0, 1, 1], [], []>} : vector<8x128xf32>, vector<128x128xf32>, vector<8x128xf32> -> vector<8x128xf32>
    %14 = vector.broadcast %5 : vector<1x128xf32> to vector<8x128xf32>
    %15 = arith.addf %13, %14 : vector<8x128xf32>
    %cst_7 = arith.constant 0.000000e+00 : f32
    %16 = vector.broadcast %cst_7 : f32 to vector<8x128xf32>
    %17 = arith.maximumf %15, %16 : vector<8x128xf32>
    %18 = vector.broadcast %6 : vector<1x128xf32> to vector<8x128xf32>
    %19 = arith.mulf %17, %18 : vector<8x128xf32>
    %cst_8 = arith.constant dense<0.000000e+00> : vector<8xf32>
    %20 = vector.multi_reduction <add>, %19, %cst_8 [1] : vector<8x128xf32> to vector<8xf32>
    %21 = vector.shape_cast %20 : vector<8xf32> to vector<8x1xf32>
    %22 = vector.broadcast %7 : vector<1x1xf32> to vector<8x1xf32>
    %23 = arith.addf %21, %22 : vector<8x1xf32>
    %c0_9 = arith.constant 0 : index
    %c0_10 = arith.constant 0 : index
    %24 = vector.load %arg3[%c0_9, %c0_10] : memref<8x1xf32, #tpu.memory_space<vmem>>, vector<8x1xf32>
    tpu.vector_store %arg3[%c0_9, %c0_10], %23 {strides = array<i32>} : memref<8x1xf32, #tpu.memory_space<vmem>>, vector<8x1xf32>,
    return
  }
  func.func @transform_0(%arg0: i32) -> (i32, i32) {
    %c0_i32 = arith.constant 0 : i32
    %c0_i32_0 = arith.constant 0 : i32
    return %arg0, %c0_i32 : i32, i32
  }
  func.func @transform_1(%arg0: i32) -> (i32, i32) {
    %c0_i32 = arith.constant 0 : i32
    %c0_i32_0 = arith.constant 0 : i32
    %c0_i32_1 = arith.constant 0 : i32
    return %c0_i32, %c0_i32_0 : i32, i32
  }
  func.func @transform_2(%arg0: i32) -> (i32, i32) {
    %c0_i32 = arith.constant 0 : i32
    %c0_i32_0 = arith.constant 0 : i32
    return %arg0, %c0_i32 : i32, i32
  }
}

</mosaic_0001>

<llo_original>
// kernel: tpu_custom_call.1
$region0: #{tpu_custom_call.1}
  #allocation0 [shape = 'u32[]', space=smem, size = 0x4, offset = 0x4, fixed_abs, tag = 'smem constant byte address 0x4 - core index']
  #allocation1 [shape = 'u32[144,128]{1,0:T(1,128)}', space=vmem, size = 0x12000, scoped, tag = 'internal scratch']
  %s0 = inlined_call_operand.hbm [shape: f32[8,8], index: 0, kind: input, shape index: {}]
  %s1 = inlined_call_operand.hbm [shape: f32[144,128], index: 1, kind: input, shape index: {}]
  %s2 = inlined_call_operand.vmem [shape: f32[8,1], index: 2, kind: output, shape index: {}]
  %s3 = sld [smem:[#allocation0]]
  $region26: #{tpu_custom_call.1} parent=0
    _
  %s5 = ssub.s32 1, %s3
  %s6 = scalar_select 0, %s5, %s3
  $region1: #{tpu_custom_call.1} parent=0
    #allocation2 [shape = 'u8[4096]{0}', space=vmem, size = 0x1000, scoped, tag = 'input window, operand 0, single buffered']
    #allocation3 [shape = 's32[1]{0}', space=sflag, size = 0x4, scoped, tag = 'scoped memory for tpu_custom_call.1']
    #allocation4 [shape = 'u8[73728]{0}', space=vmem, size = 0x12000, scoped, tag = 'input window, operand 1, single buffered']
    #allocation5 [shape = 's32[1]{0}', space=sflag, size = 0x4, scoped, tag = 'scoped memory for tpu_custom_call.1']
    %7 = vsyncpa [#allocation3], 0
    %8 = vsyncpa [#allocation5], 0
    // Predicated region
    $region2: #{tpu_custom_call.1} parent=1 // pred_check
      _
    $region3: #{tpu_custom_call.1} parent=1 // pred_check_branch
      %10 = sbr.rel (0) target = $region5
    $region4: #{tpu_custom_call.1} parent=1 // pred_region
      %s12 = ssub.s32 128, 128
      %13 = vsyncadd [#allocation3], %s12
      %s15 = sshll.u32 [#allocation2], 4
      %s16 = int_to_ptr.vmem [resolvable:$true] %s15
      %18 = dma.hbm_to_vmem [thread:$0]  %s0, 128, %s16, [#allocation3]
    $region5: #{tpu_custom_call.1} parent=1 // pred_fallthru
      _
    // Predicated region
    $region6: #{tpu_custom_call.1} parent=1 // pred_check
      _
    $region7: #{tpu_custom_call.1} parent=1 // pred_check_branch
      %20 = sbr.rel (0) target = $region9
    $region8: #{tpu_custom_call.1} parent=1 // pred_region
      %s22 = ssub.s32 2304, 2304
      %23 = vsyncadd [#allocation5], %s22
      %s24 = sshll.u32 [#allocation4], 4
      %s25 = int_to_ptr.vmem [resolvable:$true] %s24
      %30 = dma.hbm_to_vmem [thread:$0]  %s1, 2304, %s25, [#allocation5], 128, 128, 8
    $region9: #{tpu_custom_call.1} parent=1 // pred_fallthru
      _
    // Predicated region
    $region10: #{tpu_custom_call.1} parent=1 // pred_check
      _
    $region11: #{tpu_custom_call.1} parent=1 // pred_check_branch
      %32 = sbr.rel (0) target = $region13
    $region12: #{tpu_custom_call.1} parent=1 // pred_region
      %33 = dma.done [#allocation3], 128
    $region13: #{tpu_custom_call.1} parent=1 // pred_fallthru
      _
    // Predicated region
    $region14: #{tpu_custom_call.1} parent=1 // pred_check
      _
    $region15: #{tpu_custom_call.1} parent=1 // pred_check_branch
      %35 = sbr.rel (0) target = $region17
    $region16: #{tpu_custom_call.1} parent=1 // pred_region
      %36 = dma.done [#allocation5], 2304
    $region17: #{tpu_custom_call.1} parent=1 // pred_fallthru
      _
    %v37 = vld [vmem:[#allocation2] sm:$0xff]
    %v38 = vld [vmem:[#allocation4] sm:$0xff]
    %v39 = vld [vmem:[#allocation4 + $0x8] sm:$0xff]
    %v40 = vld [vmem:[#allocation4 + $0x10] sm:$0xff]
    %v41 = vld [vmem:[#allocation4 + $0x18] sm:$0xff]
    %v42 = vld [vmem:[#allocation4 + $0x20] sm:$0xff]
    %v43 = vld [vmem:[#allocation4 + $0x28] sm:$0xff]
    %v44 = vld [vmem:[#allocation4 + $0x30] sm:$0xff]
    %v45 = vld [vmem:[#allocation4 + $0x38] sm:$0xff]
    %v46 = vld [vmem:[#allocation4 + $0x40] sm:$0xff]
    %v47 = vld [vmem:[#allocation4 + $0x48] sm:$0xff]
    %v48 = vld [vmem:[#allocation4 + $0x50] sm:$0xff]
    %v49 = vld [vmem:[#allocation4 + $0x58] sm:$0xff]
    %v50 = vld [vmem:[#allocation4 + $0x60] sm:$0xff]
    %v51 = vld [vmem:[#allocation4 + $0x68] sm:$0xff]
    %v52 = vld [vmem:[#allocation4 + $0x70] sm:$0xff]
    %v53 = vld [vmem:[#allocation4 + $0x78] sm:$0xff]
    %v54 = vld [vmem:[#allocation4 + $0x80] sm:$0xff]
    %v55 = vld [vmem:[#allocation4 + $0x88] sm:$0xff]
    %v56 = vlaneseq
    %v57 = vshrl.u32 %v56, 7
    %v58 = vsub.s32 0, %v57
    %v59 = vrot.slane %v55, %v58
    %vm60 = vcmask 64512
    %v62 = vsel %vm60, %v37, 0
    %64 = vmatprep.subr.mxu0 0.0
    %65 = vmatpush1.msra.mxu0 %v54
    %66 = vmatprep.subr.mxu0 0.0
    %67 = vmatpush1.msra.mxu0 0.0
    %68 = vmatprep.subr.mxu0 0.0
    %69 = vmatpush1.msra.mxu0 0.0
    %70 = vmatprep.subr.mxu0 0.0
    %71 = vmatpush1.msra.mxu0 0.0
    %72 = vmatprep.subr.mxu0 0.0
    %73 = vmatpush1.msra.mxu0 0.0
    %74 = vmatprep.subr.mxu0 0.0
    %75 = vmatpush1.msra.mxu0 0.0
    %76 = vmatprep.subr.mxu0 0.0
    %77 = vmatpush1.msra.mxu0 0.0
    %78 = vmatprep.subr.mxu0 0.0
    %79 = vmatpush1.msra.mxu0 0.0
    %80 = vmatprep.subr.mxu0 0.0
    %81 = vmatpush1.msra.mxu0 0.0
    %82 = vmatprep.subr.mxu0 0.0
    %83 = vmatpush1.msra.mxu0 0.0
    %84 = vmatprep.subr.mxu0 0.0
    %85 = vmatpush1.msra.mxu0 0.0
    %86 = vmatprep.subr.mxu0 0.0
    %87 = vmatpush1.msra.mxu0 0.0
    %88 = vmatprep.subr.mxu0 0.0
    %89 = vmatpush1.msra.mxu0 0.0
    %90 = vmatprep.subr.mxu0 0.0
    %91 = vmatpush1.msra.mxu0 0.0
    %92 = vmatprep.subr.mxu0 0.0
    %93 = vmatpush1.msra.mxu0 0.0
    %94 = vmatprep.subr.mxu0 0.0
    %95 = vmatpush1.msra.mxu0 0.0
    %96 = vmatprep.subr.mxu0 0.0
    %97 = vmatpush1.msra.mxu0 0.0
    %98 = vmatprep.subr.mxu0 0.0
    %99 = vmatpush1.msra.mxu0 0.0
    %100 = vmatprep.subr.mxu0 0.0
    %101 = vmatpush1.msra.mxu0 0.0
    %102 = vmatprep.subr.mxu0 0.0
    %103 = vmatpush1.msra.mxu0 0.0
    %104 = vmatprep.subr.mxu0 0.0
    %105 = vmatpush1.msra.mxu0 0.0
    %106 = vmatprep.subr.mxu0 0.0
    %107 = vmatpush1.msra.mxu0 0.0
    %108 = vmatprep.subr.mxu0 0.0
    %109 = vmatpush1.msra.mxu0 0.0
    %110 = vmatprep.subr.mxu0 0.0
    %111 = vmatpush1.msra.mxu0 0.0
    %112 = vmatprep.subr.mxu0 0.0
    %113 = vmatpush1.msra.mxu0 0.0
    %114 = vmatprep.subr.mxu0 0.0
    %115 = vmatpush1.msra.mxu0 0.0
    %116 = vmatprep.subr.mxu0 0.0
    %117 = vmatpush1.msra.mxu0 0.0
    %118 = vmatprep.subr.mxu0 0.0
    %119 = vmatpush1.msra.mxu0 0.0
    %120 = vmatprep.subr.mxu0 0.0
    %121 = vmatpush1.msra.mxu0 0.0
    %122 = vmatprep.subr.mxu0 0.0
    %123 = vmatpush1.msra.mxu0 0.0
    %124 = vmatprep.subr.mxu0 0.0
    %125 = vmatpush1.msra.mxu0 0.0
    %126 = vmatprep.subr.mxu0 0.0
    %127 = vmatpush1.msra.mxu0 0.0
    %128 = vmatprep.mubr.f32.mxu0 0.0
    %129 = vmatmul.mubr.f32.gmra.mrb[0].mxu0 %v62
    %v130 = vpop.f32.mrb[0].mxu0
    %v131 = vadd.f32 %v59, %v130
    %v132 = vpop.f32.mrb[0].mxu0
    %133 = vdwg.mxu0
    %v134 = vmax.f32 %v131, 0.0
    %v135 = vlaneseq
    %v136 = vshrl.u32 %v135, 7
    %v137 = vsub.s32 1, %v136
    %v138 = vrot.slane %v55, %v137
    %139 = vmatprep.subr.mxu0 0.0
    %140 = vmatpush1.msra.mxu0 %v38
    %141 = vmatprep.subr.mxu0 0.0
    %142 = vmatpush1.msra.mxu0 %v39
    %143 = vmatprep.subr.mxu0 0.0
    %144 = vmatpush1.msra.mxu0 %v40
    %145 = vmatprep.subr.mxu0 0.0
    %146 = vmatpush1.msra.mxu0 %v41
    %147 = vmatprep.subr.mxu0 0.0
    %148 = vmatpush1.msra.mxu0 %v42
    %149 = vmatprep.subr.mxu0 0.0
    %150 = vmatpush1.msra.mxu0 %v43
    %151 = vmatprep.subr.mxu0 0.0
    %152 = vmatpush1.msra.mxu0 %v44
    %153 = vmatprep.subr.mxu0 0.0
    %154 = vmatpush1.msra.mxu0 %v45
    %155 = vmatprep.subr.mxu0 0.0
    %156 = vmatpush1.msra.mxu0 %v46
    %157 = vmatprep.subr.mxu0 0.0
    %158 = vmatpush1.msra.mxu0 %v47
    %159 = vmatprep.subr.mxu0 0.0
    %160 = vmatpush1.msra.mxu0 %v48
    %161 = vmatprep.subr.mxu0 0.0
    %162 = vmatpush1.msra.mxu0 %v49
    %163 = vmatprep.subr.mxu0 0.0
    %164 = vmatpush1.msra.mxu0 %v50
    %165 = vmatprep.subr.mxu0 0.0
    %166 = vmatpush1.msra.mxu0 %v51
    %167 = vmatprep.subr.mxu0 0.0
    %168 = vmatpush1.msra.mxu0 %v52
    %169 = vmatprep.subr.mxu0 0.0
    %170 = vmatpush1.msra.mxu0 %v53
    %171 = vmatprep.subr.mxu0 0.0
    %172 = vmatpush1.msra.mxu0 0.0
    %173 = vmatprep.subr.mxu0 0.0
    %174 = vmatpush1.msra.mxu0 0.0
    %175 = vmatprep.subr.mxu0 0.0
    %176 = vmatpush1.msra.mxu0 0.0
    %177 = vmatprep.subr.mxu0 0.0
    %178 = vmatpush1.msra.mxu0 0.0
    %179 = vmatprep.subr.mxu0 0.0
    %180 = vmatpush1.msra.mxu0 0.0
    %181 = vmatprep.subr.mxu0 0.0
    %182 = vmatpush1.msra.mxu0 0.0
    %183 = vmatprep.subr.mxu0 0.0
    %184 = vmatpush1.msra.mxu0 0.0
    %185 = vmatprep.subr.mxu0 0.0
    %186 = vmatpush1.msra.mxu0 0.0
    %187 = vmatprep.subr.mxu0 0.0
    %188 = vmatpush1.msra.mxu0 0.0
    %189 = vmatprep.subr.mxu0 0.0
    %190 = vmatpush1.msra.mxu0 0.0
    %191 = vmatprep.subr.mxu0 0.0
    %192 = vmatpush1.msra.mxu0 0.0
    %193 = vmatprep.subr.mxu0 0.0
    %194 = vmatpush1.msra.mxu0 0.0
    %195 = vmatprep.subr.mxu0 0.0
    %196 = vmatpush1.msra.mxu0 0.0
    %197 = vmatprep.subr.mxu0 0.0
    %198 = vmatpush1.msra.mxu0 0.0
    %199 = vmatprep.subr.mxu0 0.0
    %200 = vmatpush1.msra.mxu0 0.0
    %201 = vmatprep.subr.mxu0 0.0
    %202 = vmatpush1.msra.mxu0 0.0
    %203 = vmatprep.mubr.f32.mxu0 0.0
    %204 = vmatmul.mubr.f32.gmra.mrb[0].mxu0 %v134
    %v205 = vpop.f32.mrb[0].mxu0
    %v206 = vadd.f32 %v138, %v205
    %v207 = vpop.f32.mrb[0].mxu0
    %208 = vdwg.mxu0
    %v209 = vmax.f32 %v206, 0.0
    %v210 = vlaneseq
    %v211 = vshrl.u32 %v210, 7
    %v212 = vsub.s32 2, %v211
    %v213 = vrot.slane %v55, %v212
    %v214 = vmul.f32 %v209, %v213
    %215 = vadd.xlane.f32.xlu0 %v214
    %v216 = vpop.xlane.xlu0 %215
    %v217 = vlaneseq
    %v218 = vshrl.u32 %v217, 7
    %v219 = vsub.s32 3, %v218
    %v220 = vrot.slane %v55, %v219
    %v221 = vadd.f32 %v216, %v220
    %vm222 = vcmask 7168
    %223 = vst.msk [vmem:[%s2] sm:$0xff] %vm222, %v221
    // Predicated region
    $region18: #{tpu_custom_call.1} parent=1 // pred_check
      _
    $region19: #{tpu_custom_call.1} parent=1 // pred_check_branch
      %225 = sbr.rel (0) target = $region21
    $region20: #{tpu_custom_call.1} parent=1 // pred_region
      _
    $region21: #{tpu_custom_call.1} parent=1 // pred_fallthru
      _
    // Predicated region
    $region22: #{tpu_custom_call.1} parent=1 // pred_check
      _
    $region23: #{tpu_custom_call.1} parent=1 // pred_check_branch
      %227 = sbr.rel (0) target = $region25
    $region24: #{tpu_custom_call.1} parent=1 // pred_region
      _
    $region25: #{tpu_custom_call.1} parent=1 // pred_fallthru
      _
    %228 = vsyncpa [#allocation3], 1
    %229 = vsyncpa [#allocation5], 1

</llo_original>
